<compile_context>
chip_gen: v5e
topology: v5e:2x2
jax: 0.10.0
libtpu: 0.0.40
codegen_flags: <defaults>
</compile_context>

<pallas_src>
import jax
import jax.numpy as jnp
from jax import lax
from jax.experimental import pallas as pl
from jax.experimental.pallas import tpu as pltpu


def _fuse_weight(weight):
    """(Co, C, 3, 3) OIHW -> (2, 2, 4*C, 4*Co) fused conv + pixel-unshuffle weight.

    With x_s2d = space-to-depth(2) of the zero-padded NCHW input (channel order
    (ii, jj, ci)), the whole module is:
        out[b, ho, wo, co*4 + i*2 + j] =
            sum_{dI,dJ in {0,1}} x_s2d[b, ho+dI, wo+dJ, :] @ W2[dI, dJ]
    where W2[dI, dJ][(ii*2+jj)*C + ci, co*4 + i*2 + j] =
        weight[co, ci, 2*dI+ii-i, 2*dJ+jj-j]  (zero when the 3x3 tap is out of range).
    """
    Co, C, Kh, Kw = weight.shape
    assert Kh == 3 and Kw == 3
    # Embed the 3x3 kernel into a 4x4 "super kernel" per pixel-unshuffle offset (i, j).
    w4 = jnp.zeros((4 * Co, C, 4, 4), dtype=weight.dtype)
    for i in range(2):
        for j in range(2):
            w4 = w4.at[i * 2 + j::4, :, i:i + 3, j:j + 3].set(weight)
    # (oc, ci, dI, ii, dJ, jj) -> (dI, dJ, ii, jj, ci, oc)
    w4 = w4.reshape(4 * Co, C, 2, 2, 2, 2)
    w2 = jnp.transpose(w4, (2, 4, 3, 5, 1, 0)).reshape(2, 2, 4 * C, 4 * Co)
    return w2


def _down_kernel(x_ref, halo_ref, w_ref, o_ref):
    # x_ref:    (1, tr, Wp, 4C)  band of space-to-depth rows [r*tr, r*tr + tr)
    # halo_ref: (1, 1,  Wp, 4C)  space-to-depth row r*tr + tr (1-row halo)
    # w_ref:    (2, 2, 4C, N)    fused conv + pixel-unshuffle weight (resident)
    # o_ref:    (1, tr, Wo, N)   final output tile (lane-dense, N = 2*C)
    tr = x_ref.shape[1]
    Wp = x_ref.shape[2]
    Wo = Wp - 1
    n = o_ref.shape[3]

    band = x_ref[0]                                     # rows ho + 0, (tr, Wp, 4C)
    if tr == 1:
        rows_hi = halo_ref[0]                           # rows ho + 1
    else:
        rows_hi = jnp.concatenate([band[1:], halo_ref[0]], axis=0)

    def tap(rows, dj):
        # unit column shift stays in VMEM; flatten to an MXU-friendly 2-D tile
        return rows[:, dj:dj + Wo, :].reshape(tr * Wo, rows.shape[-1])

    acc = jnp.dot(tap(band, 0), w_ref[0, 0], preferred_element_type=jnp.float32)
    acc += jnp.dot(tap(band, 1), w_ref[0, 1], preferred_element_type=jnp.float32)
    acc += jnp.dot(tap(rows_hi, 0), w_ref[1, 0], preferred_element_type=jnp.float32)
    acc += jnp.dot(tap(rows_hi, 1), w_ref[1, 1], preferred_element_type=jnp.float32)
    o_ref[...] = acc.reshape(1, tr, Wo, n).astype(o_ref.dtype)


def _pick_band_rows(Ho, Wp, K4, N, in_bytes, out_bytes, batch):
    """Largest divisor of Ho whose working set fits a ~24 MiB VMEM budget while
    still leaving >= ~8 grid steps (keeps both v7x TensorCores busy)."""
    Wo = Wp - 1
    per_row = (3 * Wp * K4 * in_bytes      # streamed band (x2 buffers) + shifted copy
               + 3 * Wo * K4 * in_bytes    # tap slices / relayout slack
               + Wo * N * 4                # f32 accumulator
               + 2 * Wo * N * out_bytes)   # output block (x2 buffers)
    budget = 24 * 1024 * 1024              # well under the 48 MiB limit we request
    cap = max(1, budget // per_row)
    min_bands = min(Ho, max(1, -(-8 // max(batch, 1))))   # ceil(8 / batch)
    cap = min(int(cap), max(1, Ho // min_bands), Ho)
    tr = 1
    for d in range(1, cap + 1):
        if Ho % d == 0:
            tr = d
    return tr


def downsample_forward(x, weight, *, band_rows=None, compute_dtype=None):
    """DownSample forward.

    x:      (B, C, H, W)    NCHW
    weight: (C//2, C, 3, 3) OIHW (Conv2d, bias=False)
    returns (B, 2*C, H//2, W//2) NCHW
    """
    B, C, H, W = x.shape
    Co, Ci, Kh, Kw = weight.shape
    assert Ci == C and Kh == 3 and Kw == 3
    assert H % 2 == 0 and W % 2 == 0

    Ho, Wo = H // 2, W // 2
    Hp, Wp = Ho + 1, Wo + 1
    K4, N = 4 * C, 4 * Co
    out_dtype = x.dtype
    in_dtype = compute_dtype if compute_dtype is not None else x.dtype

    # ---- layout glue: ONE pass NCHW -> zero-pad -> space-to-depth(2), channel-last ----
    # (this is the only activation materialization; no 9x im2col in HBM)
    xp = jnp.pad(x, ((0, 0), (0, 0), (1, 1), (1, 1)))
    xp = xp.reshape(B, C, Hp, 2, Wp, 2)
    x_s2d = jnp.transpose(xp, (0, 2, 4, 3, 5, 1)).reshape(B, Hp, Wp, K4)
    x_s2d = x_s2d.astype(in_dtype)                      # 1x activation cast (bf16 path)

    w2 = _fuse_weight(weight).astype(in_dtype)          # (2, 2, 4C, N), tiny & resident

    in_bytes = jnp.dtype(in_dtype).itemsize
    out_bytes = jnp.dtype(out_dtype).itemsize
    tr = band_rows if band_rows is not None else _pick_band_rows(
        Ho, Wp, K4, N, in_bytes, out_bytes, B)
    assert Ho % tr == 0, (Ho, tr)
    n_bands = Ho // tr

    # 1-row halo per band (space-to-depth row r*tr + tr); only ~1/tr extra traffic.
    halo = x_s2d[:, tr::tr, :, :]                       # (B, n_bands, Wp, 4C)

    out_nhwc = pl.pallas_call(
        _down_kernel,
        out_shape=jax.ShapeDtypeStruct((B, Ho, Wo, N), out_dtype),
        grid=(B, n_bands),
        in_specs=[
            pl.BlockSpec((1, tr, Wp, K4), lambda b, r: (b, r, 0, 0)),  # streamed bands
            pl.BlockSpec((1, 1, Wp, K4), lambda b, r: (b, r, 0, 0)),   # halo rows
            pl.BlockSpec((2, 2, K4, N), lambda b, r: (0, 0, 0, 0)),    # resident weight
        ],
        out_specs=pl.BlockSpec((1, tr, Wo, N), lambda b, r: (b, r, 0, 0)),
        compiler_params=pltpu.CompilerParams(
            dimension_semantics=("parallel", "parallel"),  # independent tiles -> megacore
            vmem_limit_bytes=48 * 1024 * 1024,             # fits v7x's 64 MiB physical VMEM
        ),
    )(x_s2d, halo, w2)

    # TODO(synk): the final NCHW transpose is layout glue for PyTorch parity only; a
    # TPU-native consumer should keep the lane-dense (B, H/2, W/2, 2*C) output as-is.
    return jnp.transpose(out_nhwc, (0, 3, 1, 2))


def _reference_downsample(x, weight):
    """Pure-JAX reference (lax conv + pixel-unshuffle) for correctness checking."""
    y = lax.conv_general_dilated(
        x, weight, window_strides=(1, 1), padding=((1, 1), (1, 1)),
        dimension_numbers=("NCHW", "OIHW", "NCHW"))
    B, Co, H, W = y.shape
    y = y.reshape(B, Co, H // 2, 2, W // 2, 2)          # (b, c, ho, i, wo, j)
    y = jnp.transpose(y, (0, 1, 3, 5, 2, 4))            # (b, c, i, j, ho, wo)
    return y.reshape(B, 4 * Co, H // 2, W // 2)


if __name__ == "__main__":
    key = jax.random.PRNGKey(0)
    k_x, k_w = jax.random.split(key, 2)

    # small shapes consistent with the module: input_dim=4 -> conv to 2 channels,
    # PixelUnshuffle(2) -> 8 output channels at half resolution.
    B, C, H, W = 2, 4, 16, 16
    Co = C // 2

    x = jax.random.normal(k_x, (B, C, H, W), dtype=jnp.float32)
    w = jax.random.normal(k_w, (Co, C, 3, 3), dtype=jnp.float32) * 0.05

    ref = _reference_downsample(x, w)

    # f32 path
    y = downsample_forward(x, w)
    jax.block_until_ready(y)
    assert y.shape == (B, 2 * C, H // 2, W // 2), y.shape
    assert jnp.allclose(y, ref, atol=1e-3, rtol=1e-3), \
        float(jnp.max(jnp.abs(y - ref)))

    # bf16 streaming path (f32 MXU accumulation), looser tolerance
    y_bf16 = downsample_forward(x, w, compute_dtype=jnp.bfloat16)
    jax.block_until_ready(y_bf16)
    assert y_bf16.shape == ref.shape
    assert jnp.allclose(y_bf16, ref, atol=3e-2, rtol=3e-2)

    print("KERNEL_OK")
</pallas_src>

<mosaic_0001>
module attributes {stable_mosaic.version = 11 : i64} {
  func.func @_down_kernel(%arg0: i32, %arg1: i32, %arg2: memref<1x2x9x16xf32, #tpu.memory_space<vmem>>, %arg3: memref<1x1x9x16xf32, #tpu.memory_space<vmem>>, %arg4: memref<2x2x16x8xf32, #tpu.memory_space<vmem>>, %arg5: memref<1x2x8x8xf32, #tpu.memory_space<vmem>>) attributes {dimension_semantics = [#tpu.dimension_semantics<parallel>, #tpu.dimension_semantics<parallel>], iteration_bounds = array<i64: 2, 4>, scalar_prefetch = 0 : i64, scratch_operands = 0 : i64, tpu.core_type = #tpu.core_type<tc>, window_params = [{transform_indices = @transform_0, window_bounds = array<i64: 1, 2, 9, 16>}, {transform_indices = @transform_1, window_bounds = array<i64: 1, 1, 9, 16>}, {pipeline_mode = #tpu.pipeline_mode<synchronous>, transform_indices = @transform_2, window_bounds = array<i64: 2, 2, 16, 8>}, {transform_indices = @transform_3, window_bounds = array<i64: 1, 2, 8, 8>}]} {
    %c0 = arith.constant 0 : index
    %c0_0 = arith.constant 0 : index
    %c0_1 = arith.constant 0 : index
    %c0_2 = arith.constant 0 : index
    %0 = vector.load %arg2[%c0, %c0_0, %c0_1, %c0_2] : memref<1x2x9x16xf32, #tpu.memory_space<vmem>>, vector<1x2x9x16xf32>
    %1 = vector.shape_cast %0 : vector<1x2x9x16xf32> to vector<2x9x16xf32>
    %2 = vector.extract_strided_slice %1 {offsets = [1, 0, 0], sizes = [1, 9, 16], strides = [1, 1, 1]} : vector<2x9x16xf32> to vector<1x9x16xf32>
    %c0_3 = arith.constant 0 : index
    %c0_4 = arith.constant 0 : index
    %c0_5 = arith.constant 0 : index
    %c0_6 = arith.constant 0 : index
    %3 = vector.load %arg3[%c0_3, %c0_4, %c0_5, %c0_6] : memref<1x1x9x16xf32, #tpu.memory_space<vmem>>, vector<1x1x9x16xf32>
    %4 = vector.shape_cast %3 : vector<1x1x9x16xf32> to vector<1x9x16xf32>
    %5 = tpu.concatenate %2, %4 in 0 : vector<1x9x16xf32>, vector<1x9x16xf32> -> vector<2x9x16xf32>
    %6 = vector.extract_strided_slice %1 {offsets = [0, 0, 0], sizes = [2, 8, 16], strides = [1, 1, 1]} : vector<2x9x16xf32> to vector<2x8x16xf32>
    %7 = vector.shape_cast %6 : vector<2x8x16xf32> to vector<16x16xf32>
    %c0_7 = arith.constant 0 : index
    %c0_8 = arith.constant 0 : index
    %c0_9 = arith.constant 0 : index
    %c0_10 = arith.constant 0 : index
    %8 = vector.load %arg4[%c0_7, %c0_8, %c0_9, %c0_10] : memref<2x2x16x8xf32, #tpu.memory_space<vmem>>, vector<1x1x16x8xf32>
    %9 = vector.shape_cast %8 : vector<1x1x16x8xf32> to vector<16x8xf32>
    %cst = arith.constant dense<0.000000e+00> : vector<16x8xf32>
    %10 = tpu.matmul %7, %9, %cst {dimension_numbers = #tpu.dot_dimension_numbers<[1], [0], [0], [1], [0, 0, 1, 1], [], []>} : vector<16x16xf32>, vector<16x8xf32>, vector<16x8xf32> -> vector<16x8xf32>
    %11 = vector.extract_strided_slice %1 {offsets = [0, 1, 0], sizes = [2, 8, 16], strides = [1, 1, 1]} : vector<2x9x16xf32> to vector<2x8x16xf32>
    %12 = vector.shape_cast %11 : vector<2x8x16xf32> to vector<16x16xf32>
    %c0_11 = arith.constant 0 : index
    %c1 = arith.constant 1 : index
    %c0_12 = arith.constant 0 : index
    %c0_13 = arith.constant 0 : index
    %13 = vector.load %arg4[%c0_11, %c1, %c0_12, %c0_13] : memref<2x2x16x8xf32, #tpu.memory_space<vmem>>, vector<1x1x16x8xf32>
    %14 = vector.shape_cast %13 : vector<1x1x16x8xf32> to vector<16x8xf32>
    %cst_14 = arith.constant dense<0.000000e+00> : vector<16x8xf32>
    %15 = tpu.matmul %12, %14, %cst_14 {dimension_numbers = #tpu.dot_dimension_numbers<[1], [0], [0], [1], [0, 0, 1, 1], [], []>} : vector<16x16xf32>, vector<16x8xf32>, vector<16x8xf32> -> vector<16x8xf32>
    %16 = arith.addf %10, %15 : vector<16x8xf32>
    %17 = vector.extract_strided_slice %5 {offsets = [0, 0, 0], sizes = [2, 8, 16], strides = [1, 1, 1]} : vector<2x9x16xf32> to vector<2x8x16xf32>
    %18 = vector.shape_cast %17 : vector<2x8x16xf32> to vector<16x16xf32>
    %c1_15 = arith.constant 1 : index
    %c0_16 = arith.constant 0 : index
    %c0_17 = arith.constant 0 : index
    %c0_18 = arith.constant 0 : index
    %19 = vector.load %arg4[%c1_15, %c0_16, %c0_17, %c0_18] : memref<2x2x16x8xf32, #tpu.memory_space<vmem>>, vector<1x1x16x8xf32>
    %20 = vector.shape_cast %19 : vector<1x1x16x8xf32> to vector<16x8xf32>
    %cst_19 = arith.constant dense<0.000000e+00> : vector<16x8xf32>
    %21 = tpu.matmul %18, %20, %cst_19 {dimension_numbers = #tpu.dot_dimension_numbers<[1], [0], [0], [1], [0, 0, 1, 1], [], []>} : vector<16x16xf32>, vector<16x8xf32>, vector<16x8xf32> -> vector<16x8xf32>
    %22 = arith.addf %16, %21 : vector<16x8xf32>
    %23 = vector.extract_strided_slice %5 {offsets = [0, 1, 0], sizes = [2, 8, 16], strides = [1, 1, 1]} : vector<2x9x16xf32> to vector<2x8x16xf32>
    %24 = vector.shape_cast %23 : vector<2x8x16xf32> to vector<16x16xf32>
    %c1_20 = arith.constant 1 : index
    %c1_21 = arith.constant 1 : index
    %c0_22 = arith.constant 0 : index
    %c0_23 = arith.constant 0 : index
    %25 = vector.load %arg4[%c1_20, %c1_21, %c0_22, %c0_23] : memref<2x2x16x8xf32, #tpu.memory_space<vmem>>, vector<1x1x16x8xf32>
    %26 = vector.shape_cast %25 : vector<1x1x16x8xf32> to vector<16x8xf32>
    %cst_24 = arith.constant dense<0.000000e+00> : vector<16x8xf32>
    %27 = tpu.matmul %24, %26, %cst_24 {dimension_numbers = #tpu.dot_dimension_numbers<[1], [0], [0], [1], [0, 0, 1, 1], [], []>} : vector<16x16xf32>, vector<16x8xf32>, vector<16x8xf32> -> vector<16x8xf32>
    %28 = arith.addf %22, %27 : vector<16x8xf32>
    %29 = vector.shape_cast %28 : vector<16x8xf32> to vector<1x2x8x8xf32>
    %c0_25 = arith.constant 0 : index
    %c0_26 = arith.constant 0 : index
    %c0_27 = arith.constant 0 : index
    %c0_28 = arith.constant 0 : index
    %30 = vector.load %arg5[%c0_25, %c0_26, %c0_27, %c0_28] : memref<1x2x8x8xf32, #tpu.memory_space<vmem>>, vector<1x2x8x8xf32>
    tpu.vector_store %arg5[%c0_25, %c0_26, %c0_27, %c0_28], %29 {strides = array<i32>} : memref<1x2x8x8xf32, #tpu.memory_space<vmem>>, vector<1x2x8x8xf32>,
    return
  }
  func.func @transform_0(%arg0: i32, %arg1: i32) -> (i32, i32, i32, i32) {
    %c0_i32 = arith.constant 0 : i32
    %c0_i32_0 = arith.constant 0 : i32
    %c0_i32_1 = arith.constant 0 : i32
    return %arg0, %arg1, %c0_i32, %c0_i32_0 : i32, i32, i32, i32
  }
  func.func @transform_1(%arg0: i32, %arg1: i32) -> (i32, i32, i32, i32) {
    %c0_i32 = arith.constant 0 : i32
    %c0_i32_0 = arith.constant 0 : i32
    %c0_i32_1 = arith.constant 0 : i32
    return %arg0, %arg1, %c0_i32, %c0_i32_0 : i32, i32, i32, i32
  }
  func.func @transform_2(%arg0: i32, %arg1: i32) -> (i32, i32, i32, i32) {
    %c0_i32 = arith.constant 0 : i32
    %c0_i32_0 = arith.constant 0 : i32
    %c0_i32_1 = arith.constant 0 : i32
    %c0_i32_2 = arith.constant 0 : i32
    %c0_i32_3 = arith.constant 0 : i32
    return %c0_i32, %c0_i32_0, %c0_i32_1, %c0_i32_2 : i32, i32, i32, i32
  }
  func.func @transform_3(%arg0: i32, %arg1: i32) -> (i32, i32, i32, i32) {
    %c0_i32 = arith.constant 0 : i32
    %c0_i32_0 = arith.constant 0 : i32
    %c0_i32_1 = arith.constant 0 : i32
    return %arg0, %arg1, %c0_i32, %c0_i32_0 : i32, i32, i32, i32
  }
}

</mosaic_0001>

<llo_original>
// kernel: tpu_custom_call.1
$region0: #{tpu_custom_call.1}
  #allocation0 [shape = 'u32[]', space=smem, size = 0x4, offset = 0x4, fixed_abs, tag = 'smem constant byte address 0x4 - core index']
  #allocation1 [shape = 'u32[72,128]{1,0:T(1,128)}', space=vmem, size = 0x9000, scoped, tag = 'internal scratch']
  %s0 = inlined_call_operand.vmem [shape: f32[2,9,9,16], index: 0, kind: input, shape index: {}]
  %s1 = inlined_call_operand.vmem [shape: f32[2,4,9,16], index: 1, kind: input, shape index: {}]
  %s2 = inlined_call_operand.vmem [shape: f32[2,2,16,8], index: 2, kind: input, shape index: {}]
  %s3 = inlined_call_operand.hbm [shape: f32[2,8,8,8], index: 3, kind: output, shape index: {}]
  %s4 = sld [smem:[#allocation0]]
  $region45: #{tpu_custom_call.1} parent=0
    _
  %s6 = ssub.s32 1, %s4
  %s7 = scalar_select 0, %s6, %s4
  $region1: #{tpu_custom_call.1} parent=0
    #allocation2 [shape = 'u8[16384]{0}', space=vmem, size = 0x4000, scoped, tag = 'output window, operand 0']
    #allocation3 [shape = 's32[2]{0}', space=sflag, size = 0x8, scoped, tag = 'scoped memory for tpu_custom_call.1']
    %8 = vsyncpa [#allocation3], 0
    %s9 = scalar_lea.sflag [#allocation3], 1
    %10 = vsyncpa %s9, 0
    loop: start=0, step=1, limit=10
    $region2: #{tpu_custom_call.1} parent=1 // loop_pre_header
      _
    $region3: #{tpu_custom_call.1} parent=1 // loop_header
      %s12 = sphi 0, %s16
      %p13 = scmp.ge.s32.totalorder %s12, 10
      %s19 = sphi 0, %s31
      %s20 = sphi 0, %s27
      %s21 = sphi 0, %s19
      %s22 = sphi 0, %s20
      %s23 = sphi 0, %s21
      %s24 = sphi 0, %s22
      %s36 = sphi 0, %s38
      %s39 = sphi 0, %s36
      %s40 = sphi 0, %s39
      %s56 = sphi 0, %s40
      %s64 = sphi 0, %s66
      %s67 = sphi 0, %s64
      %s68 = sphi 0, %s67
      %s84 = sphi 0, %s68
      %s88 = sphi 0, %s88
      %s90 = sphi 0, %s88
      %s91 = sphi 0, %s90
      %s105 = sphi 0, %s91
      %s113 = sphi 0, %s115
      %s116 = sphi 0, %s113
      %s117 = sphi 0, %s116
      %s133 = sphi 0, %s117
    $region4: #{tpu_custom_call.1} parent=1 // loop_header_branch
      %15 = sbr.rel (%p13) target = $region8
    $region5: #{tpu_custom_call.1} parent=1 // loop_body
      %s17 = ssub.s32 %s12, 1
      %s18 = ssub.s32 %s12, 2
      %s25 = sadd.s32 1, %s20
      %p26 = scmp.ge.s32.totalorder %s25, 4
      %s27 = scalar_select %p26, 0, %s25
      %s28 = sadd.s32 1, %s19
      %s29 = scalar_select %p26, %s28, %s19
      %p30 = scmp.ge.s32.totalorder %s29, 2
      %s31 = scalar_select %p30, 0, %s29
      %s32 = ssub.s32 %s19, %s31
      %s33 = ssub.s32 %s20, %s27
      %s34 = sor.u32 %s32, %s33
      %p35 = scmp.eq.s32.totalorder %s34, 0
      %s37 = sadd.s32 %s36, 1
      %s38 = scalar_select %p35, %s36, %s37
      %p41 = pneg %p35
      %p42 = scmp.eq.s32.totalorder %s12, 7
      %p43 = por %p41, %p42
      %p44 = scmp.ne.s32.totalorder %s36, %s39
      %p45 = scmp.eq.s32.totalorder %s12, 0
      %p46 = por %p44, %p45
      %p47 = scmp.ne.s32.totalorder %s36, %s39
      %p48 = scmp.eq.s32.totalorder %s17, 7
      %p49 = por %p47, %p48
      %p50 = scmp.ne.s32.totalorder %s39, %s40
      %p51 = scmp.eq.s32.totalorder %s17, 0
      %p52 = por %p50, %p51
      %p53 = scmp.ne.s32.totalorder %s39, %s40
      %p54 = scmp.eq.s32.totalorder %s18, 7
      %p55 = por %p53, %p54
      %p57 = scmp.ne.s32.totalorder %s40, %s56
      %p58 = scmp.eq.s32.totalorder %s18, 0
      %p59 = por %p57, %p58
      %s60 = ssub.s32 %s19, %s31
      %s61 = ssub.s32 %s20, %s27
      %s62 = sor.u32 %s60, %s61
      %p63 = scmp.eq.s32.totalorder %s62, 0
      %s65 = sadd.s32 %s64, 1
      %s66 = scalar_select %p63, %s64, %s65
      %p69 = pneg %p63
      %p70 = scmp.eq.s32.totalorder %s12, 7
      %p71 = por %p69, %p70
      %p72 = scmp.ne.s32.totalorder %s64, %s67
      %p73 = scmp.eq.s32.totalorder %s12, 0
      %p74 = por %p72, %p73
      %p75 = scmp.ne.s32.totalorder %s64, %s67
      %p76 = scmp.eq.s32.totalorder %s17, 7
      %p77 = por %p75, %p76
      %p78 = scmp.ne.s32.totalorder %s67, %s68
      %p79 = scmp.eq.s32.totalorder %s17, 0
      %p80 = por %p78, %p79
      %p81 = scmp.ne.s32.totalorder %s67, %s68
      %p82 = scmp.eq.s32.totalorder %s18, 7
      %p83 = por %p81, %p82
      %p85 = scmp.ne.s32.totalorder %s68, %s84
      %p86 = scmp.eq.s32.totalorder %s18, 0
      %p87 = por %p85, %p86
      %s89 = sadd.s32 %s88, 1
      %p92 = scmp.eq.s32.totalorder %s12, 7
      %p93 = scmp.ne.s32.totalorder %s88, %s90
      %p94 = scmp.eq.s32.totalorder %s12, 0
      %p95 = por %p93, %p94
      %p96 = scmp.ne.s32.totalorder %s88, %s90
      %p97 = scmp.eq.s32.totalorder %s17, 7
      %p98 = por %p96, %p97
      %p99 = scmp.ne.s32.totalorder %s90, %s91
      %p100 = scmp.eq.s32.totalorder %s17, 0
      %p101 = por %p99, %p100
      %p102 = scmp.ne.s32.totalorder %s90, %s91
      %p103 = scmp.eq.s32.totalorder %s18, 7
      %p104 = por %p102, %p103
      %p106 = scmp.ne.s32.totalorder %s91, %s105
      %p107 = scmp.eq.s32.totalorder %s18, 0
      %p108 = por %p106, %p107
      %s109 = ssub.s32 %s19, %s31
      %s110 = ssub.s32 %s20, %s27
      %s111 = sor.u32 %s109, %s110
      %p112 = scmp.eq.s32.totalorder %s111, 0
      %s114 = sadd.s32 %s113, 1
      %s115 = scalar_select %p112, %s113, %s114
      %p118 = pneg %p112
      %p119 = scmp.eq.s32.totalorder %s12, 7
      %p120 = por %p118, %p119
      %p121 = scmp.ne.s32.totalorder %s113, %s116
      %p122 = scmp.eq.s32.totalorder %s12, 0
      %p123 = por %p121, %p122
      %p124 = scmp.ne.s32.totalorder %s113, %s116
      %p125 = scmp.eq.s32.totalorder %s17, 7
      %p126 = por %p124, %p125
      %p127 = scmp.ne.s32.totalorder %s116, %s117
      %p128 = scmp.eq.s32.totalorder %s17, 0
      %p129 = por %p127, %p128
      %p130 = scmp.ne.s32.totalorder %s116, %s117
      %p131 = scmp.eq.s32.totalorder %s18, 7
      %p132 = por %p130, %p131
      %p134 = scmp.ne.s32.totalorder %s117, %s133
      %p135 = scmp.eq.s32.totalorder %s18, 0
      %p136 = por %p134, %p135
      %p137 = scmp.le.s32.totalorder 1, %s12
      %p138 = scmp.lt.s32.totalorder %s12, 9
      %p139 = pnand %p137, %p138
      %p140 = pneg %p139
      // Predicated region
      $region9: #{tpu_custom_call.1} parent=5 // pred_check
        _
      $region10: #{tpu_custom_call.1} parent=5 // pred_check_branch
        %142 = sbr.rel (%p139) target = $region12
      $region11: #{tpu_custom_call.1} parent=5 // pred_region
        %s143 = ssub.s32 %s12, 1
        // Predicated region
        $region13: #{tpu_custom_call.1} parent=11 // pred_check
          %p144 = pneg %p101
        $region14: #{tpu_custom_call.1} parent=11 // pred_check_branch
          %146 = sbr.rel (%p144) target = $region16
        $region15: #{tpu_custom_call.1} parent=11 // pred_region
          _
        $region16: #{tpu_custom_call.1} parent=11 // pred_fallthru
          _
      $region12: #{tpu_custom_call.1} parent=5 // pred_fallthru
        _
      %p147 = scmp.lt.s32.totalorder %s12, 8
      // Predicated region
      $region17: #{tpu_custom_call.1} parent=5 // pred_check
        %p148 = pneg %p147
      $region18: #{tpu_custom_call.1} parent=5 // pred_check_branch
        %150 = sbr.rel (%p148) target = $region20
      $region19: #{tpu_custom_call.1} parent=5 // pred_region
        // Predicated region
        $region21: #{tpu_custom_call.1} parent=19 // pred_check
          %p151 = pneg %p46
        $region22: #{tpu_custom_call.1} parent=19 // pred_check_branch
          %153 = sbr.rel (%p151) target = $region24
        $region23: #{tpu_custom_call.1} parent=19 // pred_region
          %s154 = smul.u32 2, %s20
          %s155 = ssub.s32 9, %s154
          %p156 = scmp.lt.s32.totalorder %s155, 2
          %s157 = scalar_select %p156, %s155, 2
          %s158 = smul.u32 8, %s157
          %s159 = smul.u32 %s158, 2
          %p160 = scmp.lt.s32.totalorder %s19, 1
          %s161 = scalar_select %p160, %s19, 1
          %p162 = scmp.lt.s32.totalorder %s154, 8
          %s163 = scalar_select %p162, %s154, 8
          %s164 = smul.addr %s163, 2
          %s165 = smul.addr %s161, 18
          %s166 = sadd.s32 %s164, %s165
          %s167 = smul.addr %s166, 8
          %s168 = scalar_lea.vmem %s0, %s167
          %s169 = smul.u32 2, %s20
          %s170 = ssub.s32 9, %s169
          %p171 = scmp.lt.s32.totalorder %s170, 2
          %s172 = scalar_select %p171, %s170, 2
          %s173 = smul.u32 8, %s172
          %s174 = smul.u32 %s173, 2
        $region24: #{tpu_custom_call.1} parent=19 // pred_fallthru
          _
        // Predicated region
        $region25: #{tpu_custom_call.1} parent=19 // pred_check
          %p175 = pneg %p74
        $region26: #{tpu_custom_call.1} parent=19 // pred_check_branch
          %177 = sbr.rel (%p175) target = $region28
        $region27: #{tpu_custom_call.1} parent=19 // pred_region
          %p178 = scmp.lt.s32.totalorder %s19, 1
          %s179 = scalar_select %p178, %s19, 1
          %p180 = scmp.lt.s32.totalorder %s20, 3
          %s181 = scalar_select %p180, %s20, 3
          %s182 = smul.addr %s181, 2
          %s183 = smul.addr %s179, 8
          %s184 = sadd.s32 %s182, %s183
          %s185 = smul.addr %s184, 8
          %s186 = scalar_lea.vmem %s1, %s185
        $region28: #{tpu_custom_call.1} parent=19 // pred_fallthru
          _
      $region20: #{tpu_custom_call.1} parent=5 // pred_fallthru
        _
      %p187 = scmp.le.s32.totalorder 1, %s12
      %p188 = scmp.lt.s32.totalorder %s12, 9
      %p189 = pnand %p187, %p188
      %p190 = pneg %p189
      // Predicated region
      $region29: #{tpu_custom_call.1} parent=5 // pred_check
        _
      $region30: #{tpu_custom_call.1} parent=5 // pred_check_branch
        %192 = sbr.rel (%p189) target = $region32
      $region31: #{tpu_custom_call.1} parent=5 // pred_region
        %s193 = ssub.s32 %s12, 1
        %s194 = smul.u32 2, %s22
        %s195 = ssub.s32 9, %s194
        %p196 = scmp.lt.s32.totalorder %s195, 2
        %s197 = scalar_select %p196, %s195, 2
        %s198 = smul.u32 8, %s197
        %s199 = smul.u32 %s198, 2
        %p200 = scmp.lt.s32.totalorder %s21, 1
        %s201 = scalar_select %p200, %s21, 1
        %p202 = scmp.lt.s32.totalorder %s194, 8
        %s203 = scalar_select %p202, %s194, 8
        %s204 = smul.addr %s203, 2
        %s205 = smul.addr %s201, 18
        %s206 = sadd.s32 %s204, %s205
        %s207 = smul.addr %s206, 8
        %s208 = scalar_lea.vmem %s0, %s207
        %p209 = pneg %p52
        %p210 = pneg %p49
        %p211 = scmp.lt.s32.totalorder %s21, 1
        %s212 = scalar_select %p211, %s21, 1
        %p213 = scmp.lt.s32.totalorder %s22, 3
        %s214 = scalar_select %p213, %s22, 3
        %s215 = smul.addr %s214, 2
        %s216 = smul.addr %s212, 8
        %s217 = sadd.s32 %s215, %s216
        %s218 = smul.addr %s217, 8
        %s219 = scalar_lea.vmem %s1, %s218
        %p220 = pneg %p80
        %p221 = pneg %p77
        %p222 = pneg %p101
        %p223 = pneg %p98
        %p224 = pneg %p129
        %p225 = pneg %p126
        %s226 = sand.u32 %s116, 1
        %s227 = scalar_lea.sflag [#allocation3], %s226
        %s228 = sand.u32 %s116, 1
        %s229 = smul.addr %s228, 16
        %s230 = scalar_lea.vmem [#allocation2], %s229
        %s231 = smul.u32 2, %s22
        %s232 = ssub.s32 9, %s231
        %p233 = scmp.lt.s32.totalorder %s232, 2
        %s234 = scalar_select %p233, %s232, 2
        %s235 = smul.u32 8, %s234
        %s236 = smul.u32 %s235, 2
        %p237 = scmp.lt.s32.totalorder %s21, 1
        %s238 = scalar_select %p237, %s21, 1
        %p239 = scmp.lt.s32.totalorder %s231, 8
        %s240 = scalar_select %p239, %s231, 8
        %s241 = smul.addr %s240, 2
        %s242 = smul.addr %s238, 18
        %s243 = sadd.s32 %s241, %s242
        %s244 = smul.addr %s243, 8
        %s245 = scalar_lea.vmem %s0, %s244
        %s246 = smul.u32 2, %s22
        %s247 = ssub.s32 9, %s246
        %p248 = scmp.lt.s32.totalorder %s247, 2
        %s249 = scalar_select %p248, %s247, 2
        %s250 = smul.u32 8, %s249
        %s251 = smul.u32 %s250, 2
        %p252 = scmp.lt.s32.totalorder %s21, 1
        %s253 = scalar_select %p252, %s21, 1
        %p254 = scmp.lt.s32.totalorder %s22, 3
        %s255 = scalar_select %p254, %s22, 3
        %s256 = smul.addr %s255, 2
        %s257 = smul.addr %s253, 8
        %s258 = sadd.s32 %s256, %s257
        %s259 = smul.addr %s258, 8
        %s260 = scalar_lea.vmem %s1, %s259
        %s261 = smul.u32 2, %s22
        %v262 = vld [vmem:[%s245] sm:$0xff]
        %v263 = vld [vmem:[%s245 + $0x8] sm:$0x1]
        %v264 = vld [vmem:[%s245 + $0x10] sm:$0xff]
        %v265 = vld [vmem:[%s245 + $0x18] sm:$0x1]
        %v266 = vld [vmem:[%s260] sm:$0xff]
        %v267 = vld [vmem:[%s260 + $0x8] sm:$0x1]
        %v268 = vld [vmem:[%s2] sm:$0xff]
        %v269 = vld [vmem:[%s2 + $0x8] sm:$0xff]
        %vm274 = vcmask 1046528
        %v275 = vrot.slane %v262, 1
        %v276 = vrot.slane %v263, 1
        %v277 = vsel %vm274, %v275, %v276
        %v278 = vrot.slane %v264, 1
        %v279 = vrot.slane %v265, 1
        %v280 = vsel %vm274, %v278, %v279
        %s281 = scalar_lea.vmem %s2, 16
        %v282 = vld [vmem:[%s281] sm:$0xff]
        %v283 = vld [vmem:[%s281 + $0x8] sm:$0xff]
        %vm284 = vcmask 130048
        %v285 = vsel %vm284, %v277, 0
        %v287 = vsel %vm284, %v280, 0
        %289 = vmatpush.msra.mxu0 0.0
        %290 = vmatpush.msra.mxu0 0.0
        %291 = vmatpush.msra.mxu0 0.0
        %292 = vmatpush.msra.mxu0 0.0
        %293 = vmatpush.msra.mxu0 0.0
        %294 = vmatpush.msra.mxu0 0.0
        %295 = vmatpush.msra.mxu0 0.0
        %296 = vmatpush.msra.mxu0 0.0
        %297 = vmatpush.msra.mxu0 0.0
        %298 = vmatpush.msra.mxu0 0.0
        %299 = vmatpush.msra.mxu0 0.0
        %300 = vmatpush.msra.mxu0 0.0
        %301 = vmatpush.msra.mxu0 0.0
        %302 = vmatpush.msra.mxu0 0.0
        %303 = vmatpush.msra.mxu0 %v283
        %304 = vmatpush.msra.mxu0 %v282
        %305 = vmatmul.f32.gmra.mxu0 %v285
        %v306 = vpop.f32.mrf.mxu0
        %v307 = vadd.f32 0.0, %v306
        %308 = vmatmul.f32.gmra.mxu0 %v287
        %v309 = vpop.f32.mrf.mxu0
        %v310 = vadd.f32 0.0, %v309
        %311 = vdwg.mxu0
        %v312 = vsel %vm284, %v262, 0
        %v314 = vsel %vm284, %v264, 0
        %316 = vmatpush.msra.mxu0 0.0
        %317 = vmatpush.msra.mxu0 0.0
        %318 = vmatpush.msra.mxu0 0.0
        %319 = vmatpush.msra.mxu0 0.0
        %320 = vmatpush.msra.mxu0 0.0
        %321 = vmatpush.msra.mxu0 0.0
        %322 = vmatpush.msra.mxu0 0.0
        %323 = vmatpush.msra.mxu0 0.0
        %324 = vmatpush.msra.mxu0 0.0
        %325 = vmatpush.msra.mxu0 0.0
        %326 = vmatpush.msra.mxu0 0.0
        %327 = vmatpush.msra.mxu0 0.0
        %328 = vmatpush.msra.mxu0 0.0
        %329 = vmatpush.msra.mxu0 0.0
        %330 = vmatpush.msra.mxu0 %v269
        %331 = vmatpush.msra.mxu0 %v268
        %332 = vmatmul.f32.gmra.mxu0 %v312
        %v333 = vpop.f32.mrf.mxu0
        %v334 = vadd.f32 %v307, %v333
        %335 = vmatmul.f32.gmra.mxu0 %v314
        %v336 = vpop.f32.mrf.mxu0
        %v337 = vadd.f32 %v310, %v336
        %338 = vdwg.mxu0
        %s339 = scalar_lea.vmem %s2, 32
        %v340 = vld [vmem:[%s339] sm:$0xff]
        %v341 = vld [vmem:[%s339 + $0x8] sm:$0xff]
        %v343 = vsel %vm284, %v266, 0
        %345 = vmatpush.msra.mxu0 0.0
        %346 = vmatpush.msra.mxu0 0.0
        %347 = vmatpush.msra.mxu0 0.0
        %348 = vmatpush.msra.mxu0 0.0
        %349 = vmatpush.msra.mxu0 0.0
        %350 = vmatpush.msra.mxu0 0.0
        %351 = vmatpush.msra.mxu0 0.0
        %352 = vmatpush.msra.mxu0 0.0
        %353 = vmatpush.msra.mxu0 0.0
        %354 = vmatpush.msra.mxu0 0.0
        %355 = vmatpush.msra.mxu0 0.0
        %356 = vmatpush.msra.mxu0 0.0
        %357 = vmatpush.msra.mxu0 0.0
        %358 = vmatpush.msra.mxu0 0.0
        %359 = vmatpush.msra.mxu0 %v341
        %360 = vmatpush.msra.mxu0 %v340
        %361 = vmatmul.f32.gmra.mxu0 %v314
        %v362 = vpop.f32.mrf.mxu0
        %v363 = vadd.f32 0.0, %v362
        %364 = vmatmul.f32.gmra.mxu0 %v343
        %v365 = vpop.f32.mrf.mxu0
        %v366 = vadd.f32 0.0, %v365
        %367 = vdwg.mxu0
        %v368 = vadd.f32 %v334, %v363
        %v369 = vadd.f32 %v337, %v366
        %v371 = vrot.slane %v266, 1
        %v372 = vrot.slane %v267, 1
        %v373 = vsel %vm274, %v371, %v372
        %s374 = scalar_lea.vmem %s2, 48
        %v375 = vld [vmem:[%s374] sm:$0xff]
        %v376 = vld [vmem:[%s374 + $0x8] sm:$0xff]
        %v377 = vsel %vm284, %v373, 0
        %379 = vmatpush.msra.mxu0 0.0
        %380 = vmatpush.msra.mxu0 0.0
        %381 = vmatpush.msra.mxu0 0.0
        %382 = vmatpush.msra.mxu0 0.0
        %383 = vmatpush.msra.mxu0 0.0
        %384 = vmatpush.msra.mxu0 0.0
        %385 = vmatpush.msra.mxu0 0.0
        %386 = vmatpush.msra.mxu0 0.0
        %387 = vmatpush.msra.mxu0 0.0
        %388 = vmatpush.msra.mxu0 0.0
        %389 = vmatpush.msra.mxu0 0.0
        %390 = vmatpush.msra.mxu0 0.0
        %391 = vmatpush.msra.mxu0 0.0
        %392 = vmatpush.msra.mxu0 0.0
        %393 = vmatpush.msra.mxu0 %v376
        %394 = vmatpush.msra.mxu0 %v375
        %395 = vmatmul.f32.gmra.mxu0 %v287
        %v396 = vpop.f32.mrf.mxu0
        %v397 = vadd.f32 0.0, %v396
        %398 = vmatmul.f32.gmra.mxu0 %v377
        %v399 = vpop.f32.mrf.mxu0
        %v400 = vadd.f32 0.0, %v399
        %401 = vdwg.mxu0
        %v402 = vadd.f32 %v368, %v397
        %v403 = vadd.f32 %v369, %v400
        %vm404 = vcmask 64512
        %405 = vst.msk [vmem:[%s230] sm:$0xff] %vm404, %v402
        %406 = vst.msk [vmem:[%s230 + $0x8] sm:$0xff] %vm404, %v403
        %s407 = sand.u32 %s116, 1
        %s408 = scalar_lea.sflag [#allocation3], %s407
        %s409 = sand.u32 %s116, 1
        %s410 = smul.addr %s409, 16
        %s411 = scalar_lea.vmem [#allocation2], %s410
        // Predicated region
        $region33: #{tpu_custom_call.1} parent=31 // pred_check
          %p412 = pneg %p126
        $region34: #{tpu_custom_call.1} parent=31 // pred_check_branch
          %414 = sbr.rel (%p412) target = $region36
        $region35: #{tpu_custom_call.1} parent=31 // pred_region
          %s415 = smul.u32 2, %s22
          %417 = vsyncadd %s408, 0
          %s418 = smul.addr %s21, 8
          %s419 = sadd.s32 %s415, %s418
          %s420 = smul.addr %s419, 8
          %s421 = scalar_lea.hbm %s3, %s420
          %s422 = sshll.u32 %s411, 4
          %s423 = int_to_ptr.vmem [resolvable:$true] %s422
          %s424 = sshll.u32 %s421, 4
          %s425 = int_to_ptr.hbm [resolvable:$true] %s424
          %430 = dma.vmem_to_hbm [thread:$0]  %s423, 256, %s425, %s408, 128, 128, 8
        $region36: #{tpu_custom_call.1} parent=31 // pred_fallthru
          _
      $region32: #{tpu_custom_call.1} parent=5 // pred_fallthru
        _
      %p431 = scmp.le.s32.totalorder 2, %s12
      // Predicated region
      $region37: #{tpu_custom_call.1} parent=5 // pred_check
        %p432 = pneg %p431
      $region38: #{tpu_custom_call.1} parent=5 // pred_check_branch
        %434 = sbr.rel (%p432) target = $region40
      $region39: #{tpu_custom_call.1} parent=5 // pred_region
        %s435 = ssub.s32 %s12, 2
        // Predicated region
        $region41: #{tpu_custom_call.1} parent=39 // pred_check
          %p436 = pneg %p132
        $region42: #{tpu_custom_call.1} parent=39 // pred_check_branch
          %438 = sbr.rel (%p436) target = $region44
        $region43: #{tpu_custom_call.1} parent=39 // pred_region
          %s439 = sand.u32 %s117, 1
          %s440 = scalar_lea.sflag [#allocation3], %s439
          %s441 = sand.u32 %s117, 1
          %s442 = smul.addr %s441, 16
          %s443 = scalar_lea.vmem [#allocation2], %s442
          %445 = dma.done %s440, 256
        $region44: #{tpu_custom_call.1} parent=39 // pred_fallthru
          _
      $region40: #{tpu_custom_call.1} parent=5 // pred_fallthru
        _
    $region6: #{tpu_custom_call.1} parent=1 // loop_footer
      %s16 = sadd.s32 1, %s12
    $region7: #{tpu_custom_call.1} parent=1 // loop_footer_branch
      %11 = sbr.rel target = $region3
    $region8: #{tpu_custom_call.1} parent=1 // loop_exit
      _
    %446 = vsyncpa [#allocation3], 1
    %s447 = scalar_lea.sflag [#allocation3], 1
    %448 = vsyncpa %s447, 1

</llo_original>
